<compile_context>
chip_gen: v5e
topology: v5e:2x2
jax: 0.10.0
libtpu: 0.0.40
codegen_flags: <defaults>
</compile_context>

<pallas_src>
import jax
import jax.numpy as jnp
from jax.experimental import pallas as pl
from jax.experimental.pallas import tpu as pltpu


# ----------------------------------------------------------------------------
# Kernel
# ----------------------------------------------------------------------------
def _critic_kernel(state_ref, action_ref,
                   ws_ref, wa_ref, bh_ref,
                   wm_ref, bm_ref,
                   wo_ref, bo_ref,
                   out_ref):
    s = state_ref[...]   # (TB, input_dim)
    a = action_ref[...]  # (TB, n_action)

    # layer 1: concat([state, action]) @ [W1 || W3]  ==  s @ Ws + a @ Wa
    h1 = (jnp.dot(s, ws_ref[...], preferred_element_type=jnp.float32)
          + jnp.dot(a, wa_ref[...], preferred_element_type=jnp.float32)
          + bh_ref[...])
    h1 = jnp.maximum(h1, 0.0)                        # (TB, 2*fc1)

    # layer 2: block-diag(W2, W4)
    h2 = jnp.dot(h1, wm_ref[...], preferred_element_type=jnp.float32) + bm_ref[...]
    h2 = jnp.maximum(h2, 0.0)                        # (TB, 2*fc2)

    # output layer: block-diag(wq, wq2) -> columns are (q, q2)
    out_ref[...] = (jnp.dot(h2, wo_ref[...], preferred_element_type=jnp.float32)
                    + bo_ref[...])                   # (TB, 2)


# ----------------------------------------------------------------------------
# Wrapper
# ----------------------------------------------------------------------------
def critic_forward(state, action, packed, *, batch_tile=512):
    """Twin-Q critic forward pass.

    state:  (B, input_dim)  float
    action: (B, n_action)   float
    packed: dict from pack_critic_params()
    returns (q, q2), each (B, 1) float32.
    """
    state = state.astype(jnp.float32)
    action = action.astype(jnp.float32)
    B, input_dim = state.shape
    n_action = action.shape[1]

    ws, wa = packed["ws"], packed["wa"]
    bh, wm, bm, wo, bo = (packed["bh"], packed["wm"], packed["bm"],
                          packed["wo"], packed["bo"])
    h1_dim = ws.shape[1]    # 2*fc1
    h2_dim = wm.shape[1]    # 2*fc2

    # Batch tile: multiple of 8 sublanes, no bigger than the (8-rounded) batch.
    b8 = ((B + 7) // 8) * 8
    tb = max(8, (min(b8, batch_tile) // 8) * 8)
    b_pad = ((b8 + tb - 1) // tb) * tb
    if b_pad != B:
        pad = b_pad - B
        state = jnp.pad(state, ((0, pad), (0, 0)))
        action = jnp.pad(action, ((0, pad), (0, 0)))

    grid = (b_pad // tb,)

    def batch_block(shape):
        return pl.BlockSpec(shape, lambda i: (i, 0))

    def resident(shape):
        # Same block every grid step -> weights stay resident in VMEM.
        return pl.BlockSpec(shape, lambda i: (0, 0))

    out = pl.pallas_call(
        _critic_kernel,
        out_shape=jax.ShapeDtypeStruct((b_pad, 2), jnp.float32),
        grid=grid,
        in_specs=[
            batch_block((tb, input_dim)),      # state
            batch_block((tb, n_action)),       # action
            resident((input_dim, h1_dim)),     # ws
            resident((n_action, h1_dim)),      # wa
            resident((1, h1_dim)),             # bh
            resident((h1_dim, h2_dim)),        # wm
            resident((1, h2_dim)),             # bm
            resident((h2_dim, 2)),             # wo
            resident((1, 2)),                  # bo
        ],
        out_specs=batch_block((tb, 2)),
        compiler_params=pltpu.CompilerParams(
            dimension_semantics=("parallel",)),
    )(state, action, ws, wa, bh, wm, bm, wo, bo)

    out = out[:B]
    return out[:, 0:1], out[:, 1:2]


# ----------------------------------------------------------------------------
# Parameter init (matches PyTorch: xavier_uniform weights, zero biases) and
# one-time packing into the fused layout used by the kernel.
# ----------------------------------------------------------------------------
def _xavier_uniform(key, fan_in, fan_out):
    limit = jnp.sqrt(6.0 / (fan_in + fan_out))
    return jax.random.uniform(key, (fan_in, fan_out), jnp.float32, -limit, limit)


def init_critic_params(key, input_dim, n_action, fc1_dim, fc2_dim):
    d_in = input_dim + n_action
    keys = jax.random.split(key, 6)
    return {
        # head 1
        "w1": _xavier_uniform(keys[0], d_in, fc1_dim),
        "b1": jnp.zeros((1, fc1_dim), jnp.float32),
        "w2": _xavier_uniform(keys[1], fc1_dim, fc2_dim),
        "b2": jnp.zeros((1, fc2_dim), jnp.float32),
        "wq": _xavier_uniform(keys[2], fc2_dim, 1),
        "bq": jnp.zeros((1, 1), jnp.float32),
        # head 2
        "w3": _xavier_uniform(keys[3], d_in, fc1_dim),
        "b3": jnp.zeros((1, fc1_dim), jnp.float32),
        "w4": _xavier_uniform(keys[4], fc1_dim, fc2_dim),
        "b4": jnp.zeros((1, fc2_dim), jnp.float32),
        "wq2": _xavier_uniform(keys[5], fc2_dim, 1),
        "bq2": jnp.zeros((1, 1), jnp.float32),
    }


def pack_critic_params(p, input_dim):
    """Pack the twin heads once: side-by-side first layer, block-diag rest."""
    fc1 = p["w1"].shape[1]
    fc2 = p["w2"].shape[1]
    z_mid = jnp.zeros((fc1, fc2), jnp.float32)
    z_out = jnp.zeros((fc2, 1), jnp.float32)

    w1_packed = jnp.concatenate([p["w1"], p["w3"]], axis=1)     # (d_in, 2*fc1)
    return {
        "ws": w1_packed[:input_dim],                            # (input_dim, 2*fc1)
        "wa": w1_packed[input_dim:],                            # (n_action, 2*fc1)
        "bh": jnp.concatenate([p["b1"], p["b3"]], axis=1),      # (1, 2*fc1)
        "wm": jnp.block([[p["w2"], z_mid], [z_mid, p["w4"]]]),  # (2*fc1, 2*fc2)
        "bm": jnp.concatenate([p["b2"], p["b4"]], axis=1),      # (1, 2*fc2)
        "wo": jnp.block([[p["wq"], z_out], [z_out, p["wq2"]]]), # (2*fc2, 2)
        "bo": jnp.concatenate([p["bq"], p["bq2"]], axis=1),     # (1, 2)
    }


# ----------------------------------------------------------------------------
# Pure-JAX reference (mirrors the PyTorch forward exactly)
# ----------------------------------------------------------------------------
def _reference(state, action, p):
    x = jnp.concatenate([state, action], axis=1)
    h = jax.nn.relu(x @ p["w1"] + p["b1"])
    h = jax.nn.relu(h @ p["w2"] + p["b2"])
    q = h @ p["wq"] + p["bq"]
    g = jax.nn.relu(x @ p["w3"] + p["b3"])
    g = jax.nn.relu(g @ p["w4"] + p["b4"])
    q2 = g @ p["wq2"] + p["bq2"]
    return q, q2


if __name__ == "__main__":
    batch = 8
    input_dim = 24
    n_action = 8
    fc1_dim = 64    # fused first hidden = 2*64 = 128 lanes (one full vreg row)
    fc2_dim = 32

    root = jax.random.PRNGKey(0)
    k_state, k_action, k_params = jax.random.split(root, 3)

    state = jax.random.normal(k_state, (batch, input_dim), jnp.float32)
    action = jax.random.normal(k_action, (batch, n_action), jnp.float32)
    params = init_critic_params(k_params, input_dim, n_action, fc1_dim, fc2_dim)
    packed = pack_critic_params(params, input_dim)

    q, q2 = critic_forward(state, action, packed)
    q = jax.block_until_ready(q)
    q2 = jax.block_until_ready(q2)

    q_ref, q2_ref = _reference(state, action, params)
    assert q.shape == (batch, 1) and q2.shape == (batch, 1)
    assert jnp.allclose(q, q_ref, atol=2e-4, rtol=2e-4), (
        f"q mismatch: max abs err {jnp.max(jnp.abs(q - q_ref))}")
    assert jnp.allclose(q2, q2_ref, atol=2e-4, rtol=2e-4), (
        f"q2 mismatch: max abs err {jnp.max(jnp.abs(q2 - q2_ref))}")

    print("KERNEL_OK")
</pallas_src>

<mosaic_0001>
module attributes {stable_mosaic.version = 11 : i64} {
  func.func @_critic_kernel(%arg0: i32, %arg1: memref<8x24xf32, #tpu.memory_space<vmem>>, %arg2: memref<8x8xf32, #tpu.memory_space<vmem>>, %arg3: memref<24x128xf32, #tpu.memory_space<vmem>>, %arg4: memref<8x128xf32, #tpu.memory_space<vmem>>, %arg5: memref<1x128xf32, #tpu.memory_space<vmem>>, %arg6: memref<128x64xf32, #tpu.memory_space<vmem>>, %arg7: memref<1x64xf32, #tpu.memory_space<vmem>>, %arg8: memref<64x2xf32, #tpu.memory_space<vmem>>, %arg9: memref<1x2xf32, #tpu.memory_space<vmem>>, %arg10: memref<8x2xf32, #tpu.memory_space<vmem>>) attributes {dimension_semantics = [#tpu.dimension_semantics<parallel>], iteration_bounds = array<i64: 1>, scalar_prefetch = 0 : i64, scratch_operands = 0 : i64, tpu.core_type = #tpu.core_type<tc>, window_params = [{transform_indices = @transform_0, window_bounds = array<i64: 8, 24>}, {transform_indices = @transform_1, window_bounds = array<i64: 8, 8>}, {pipeline_mode = #tpu.pipeline_mode<synchronous>, transform_indices = @transform_2, window_bounds = array<i64: 24, 128>}, {pipeline_mode = #tpu.pipeline_mode<synchronous>, transform_indices = @transform_3, window_bounds = array<i64: 8, 128>}, {pipeline_mode = #tpu.pipeline_mode<synchronous>, transform_indices = @transform_4, window_bounds = array<i64: 1, 128>}, {pipeline_mode = #tpu.pipeline_mode<synchronous>, transform_indices = @transform_5, window_bounds = array<i64: 128, 64>}, {pipeline_mode = #tpu.pipeline_mode<synchronous>, transform_indices = @transform_6, window_bounds = array<i64: 1, 64>}, {pipeline_mode = #tpu.pipeline_mode<synchronous>, transform_indices = @transform_7, window_bounds = array<i64: 64, 2>}, {pipeline_mode = #tpu.pipeline_mode<synchronous>, transform_indices = @transform_8, window_bounds = array<i64: 1, 2>}, {transform_indices = @transform_9, window_bounds = array<i64: 8, 2>}]} {
    %c0 = arith.constant 0 : index
    %c0_0 = arith.constant 0 : index
    %0 = vector.load %arg1[%c0, %c0_0] : memref<8x24xf32, #tpu.memory_space<vmem>>, vector<8x24xf32>
    %c0_1 = arith.constant 0 : index
    %c0_2 = arith.constant 0 : index
    %1 = vector.load %arg2[%c0_1, %c0_2] : memref<8x8xf32, #tpu.memory_space<vmem>>, vector<8x8xf32>
    %c0_3 = arith.constant 0 : index
    %c0_4 = arith.constant 0 : index
    %2 = vector.load %arg3[%c0_3, %c0_4] : memref<24x128xf32, #tpu.memory_space<vmem>>, vector<24x128xf32>
    %cst = arith.constant dense<0.000000e+00> : vector<8x128xf32>
    %3 = tpu.matmul %0, %2, %cst {dimension_numbers = #tpu.dot_dimension_numbers<[1], [0], [0], [1], [0, 0, 1, 1], [], []>} : vector<8x24xf32>, vector<24x128xf32>, vector<8x128xf32> -> vector<8x128xf32>
    %c0_5 = arith.constant 0 : index
    %c0_6 = arith.constant 0 : index
    %4 = vector.load %arg4[%c0_5, %c0_6] : memref<8x128xf32, #tpu.memory_space<vmem>>, vector<8x128xf32>
    %cst_7 = arith.constant dense<0.000000e+00> : vector<8x128xf32>
    %5 = tpu.matmul %1, %4, %cst_7 {dimension_numbers = #tpu.dot_dimension_numbers<[1], [0], [0], [1], [0, 0, 1, 1], [], []>} : vector<8x8xf32>, vector<8x128xf32>, vector<8x128xf32> -> vector<8x128xf32>
    %6 = arith.addf %3, %5 : vector<8x128xf32>
    %c0_8 = arith.constant 0 : index
    %c0_9 = arith.constant 0 : index
    %7 = vector.load %arg5[%c0_8, %c0_9] : memref<1x128xf32, #tpu.memory_space<vmem>>, vector<1x128xf32>
    %8 = vector.broadcast %7 : vector<1x128xf32> to vector<8x128xf32>
    %9 = arith.addf %6, %8 : vector<8x128xf32>
    %cst_10 = arith.constant 0.000000e+00 : f32
    %10 = vector.broadcast %cst_10 : f32 to vector<8x128xf32>
    %11 = arith.maximumf %9, %10 : vector<8x128xf32>
    %c0_11 = arith.constant 0 : index
    %c0_12 = arith.constant 0 : index
    %12 = vector.load %arg6[%c0_11, %c0_12] : memref<128x64xf32, #tpu.memory_space<vmem>>, vector<128x64xf32>
    %cst_13 = arith.constant dense<0.000000e+00> : vector<8x64xf32>
    %13 = tpu.matmul %11, %12, %cst_13 {dimension_numbers = #tpu.dot_dimension_numbers<[1], [0], [0], [1], [0, 0, 1, 1], [], []>} : vector<8x128xf32>, vector<128x64xf32>, vector<8x64xf32> -> vector<8x64xf32>
    %c0_14 = arith.constant 0 : index
    %c0_15 = arith.constant 0 : index
    %14 = vector.load %arg7[%c0_14, %c0_15] : memref<1x64xf32, #tpu.memory_space<vmem>>, vector<1x64xf32>
    %15 = vector.broadcast %14 : vector<1x64xf32> to vector<8x64xf32>
    %16 = arith.addf %13, %15 : vector<8x64xf32>
    %cst_16 = arith.constant 0.000000e+00 : f32
    %17 = vector.broadcast %cst_16 : f32 to vector<8x64xf32>
    %18 = arith.maximumf %16, %17 : vector<8x64xf32>
    %c0_17 = arith.constant 0 : index
    %c0_18 = arith.constant 0 : index
    %19 = vector.load %arg8[%c0_17, %c0_18] : memref<64x2xf32, #tpu.memory_space<vmem>>, vector<64x2xf32>
    %cst_19 = arith.constant dense<0.000000e+00> : vector<8x2xf32>
    %20 = tpu.matmul %18, %19, %cst_19 {dimension_numbers = #tpu.dot_dimension_numbers<[1], [0], [0], [1], [0, 0, 1, 1], [], []>} : vector<8x64xf32>, vector<64x2xf32>, vector<8x2xf32> -> vector<8x2xf32>
    %c0_20 = arith.constant 0 : index
    %c0_21 = arith.constant 0 : index
    %21 = vector.load %arg9[%c0_20, %c0_21] : memref<1x2xf32, #tpu.memory_space<vmem>>, vector<1x2xf32>
    %22 = vector.broadcast %21 : vector<1x2xf32> to vector<8x2xf32>
    %23 = arith.addf %20, %22 : vector<8x2xf32>
    %c0_22 = arith.constant 0 : index
    %c0_23 = arith.constant 0 : index
    %24 = vector.load %arg10[%c0_22, %c0_23] : memref<8x2xf32, #tpu.memory_space<vmem>>, vector<8x2xf32>
    tpu.vector_store %arg10[%c0_22, %c0_23], %23 {strides = array<i32>} : memref<8x2xf32, #tpu.memory_space<vmem>>, vector<8x2xf32>,
    return
  }
  func.func @transform_0(%arg0: i32) -> (i32, i32) {
    %c0_i32 = arith.constant 0 : i32
    %c0_i32_0 = arith.constant 0 : i32
    return %arg0, %c0_i32 : i32, i32
  }
  func.func @transform_1(%arg0: i32) -> (i32, i32) {
    %c0_i32 = arith.constant 0 : i32
    %c0_i32_0 = arith.constant 0 : i32
    return %arg0, %c0_i32 : i32, i32
  }
  func.func @transform_2(%arg0: i32) -> (i32, i32) {
    %c0_i32 = arith.constant 0 : i32
    %c0_i32_0 = arith.constant 0 : i32
    %c0_i32_1 = arith.constant 0 : i32
    return %c0_i32, %c0_i32_0 : i32, i32
  }
  func.func @transform_3(%arg0: i32) -> (i32, i32) {
    %c0_i32 = arith.constant 0 : i32
    %c0_i32_0 = arith.constant 0 : i32
    %c0_i32_1 = arith.constant 0 : i32
    return %c0_i32, %c0_i32_0 : i32, i32
  }
  func.func @transform_4(%arg0: i32) -> (i32, i32) {
    %c0_i32 = arith.constant 0 : i32
    %c0_i32_0 = arith.constant 0 : i32
    %c0_i32_1 = arith.constant 0 : i32
    return %c0_i32, %c0_i32_0 : i32, i32
  }
  func.func @transform_5(%arg0: i32) -> (i32, i32) {
    %c0_i32 = arith.constant 0 : i32
    %c0_i32_0 = arith.constant 0 : i32
    %c0_i32_1 = arith.constant 0 : i32
    return %c0_i32, %c0_i32_0 : i32, i32
  }
  func.func @transform_6(%arg0: i32) -> (i32, i32) {
    %c0_i32 = arith.constant 0 : i32
    %c0_i32_0 = arith.constant 0 : i32
    %c0_i32_1 = arith.constant 0 : i32
    return %c0_i32, %c0_i32_0 : i32, i32
  }
  func.func @transform_7(%arg0: i32) -> (i32, i32) {
    %c0_i32 = arith.constant 0 : i32
    %c0_i32_0 = arith.constant 0 : i32
    %c0_i32_1 = arith.constant 0 : i32
    return %c0_i32, %c0_i32_0 : i32, i32
  }
  func.func @transform_8(%arg0: i32) -> (i32, i32) {
    %c0_i32 = arith.constant 0 : i32
    %c0_i32_0 = arith.constant 0 : i32
    %c0_i32_1 = arith.constant 0 : i32
    return %c0_i32, %c0_i32_0 : i32, i32
  }
  func.func @transform_9(%arg0: i32) -> (i32, i32) {
    %c0_i32 = arith.constant 0 : i32
    %c0_i32_0 = arith.constant 0 : i32
    return %arg0, %c0_i32 : i32, i32
  }
}

</mosaic_0001>

<llo_original>
// kernel: tpu_custom_call.1
$region0: #{tpu_custom_call.1}
  #allocation0 [shape = 'u32[]', space=smem, size = 0x4, offset = 0x4, fixed_abs, tag = 'smem constant byte address 0x4 - core index']
  #allocation1 [shape = 'u32[72,128]{1,0:T(1,128)}', space=vmem, size = 0x9000, scoped, tag = 'internal scratch']
  %s0 = inlined_call_operand.vmem [shape: f32[8,24], index: 0, kind: input, shape index: {}]
  %s1 = inlined_call_operand.vmem [shape: f32[8,8], index: 1, kind: input, shape index: {}]
  %s2 = inlined_call_operand.vmem [shape: f32[24,128], index: 2, kind: input, shape index: {}]
  %s3 = inlined_call_operand.vmem [shape: f32[8,128], index: 3, kind: input, shape index: {}]
  %s4 = inlined_call_operand.vmem [shape: f32[1,128], index: 4, kind: input, shape index: {}]
  %s5 = inlined_call_operand.vmem [shape: f32[128,64], index: 5, kind: input, shape index: {}]
  %s6 = inlined_call_operand.vmem [shape: f32[1,64], index: 6, kind: input, shape index: {}]
  %s7 = inlined_call_operand.vmem [shape: f32[64,2], index: 7, kind: input, shape index: {}]
  %s8 = inlined_call_operand.vmem [shape: f32[1,2], index: 8, kind: input, shape index: {}]
  %s9 = inlined_call_operand.vmem [shape: f32[8,2], index: 9, kind: output, shape index: {}]
  %s10 = sld [smem:[#allocation0]]
  $region46: #{tpu_custom_call.1} parent=0
    _
  %s12 = ssub.s32 1, %s10
  %s13 = scalar_select 0, %s12, %s10
  // Predicated region
  $region2: #{tpu_custom_call.1} parent=0 // pred_check
    _
  $region3: #{tpu_custom_call.1} parent=0 // pred_check_branch
    %15 = sbr.rel (0) target = $region5
  $region4: #{tpu_custom_call.1} parent=0 // pred_region
    _
  $region5: #{tpu_custom_call.1} parent=0 // pred_fallthru
    _
  // Predicated region
  $region6: #{tpu_custom_call.1} parent=0 // pred_check
    _
  $region7: #{tpu_custom_call.1} parent=0 // pred_check_branch
    %17 = sbr.rel (0) target = $region9
  $region8: #{tpu_custom_call.1} parent=0 // pred_region
    _
  $region9: #{tpu_custom_call.1} parent=0 // pred_fallthru
    _
  // Predicated region
  $region10: #{tpu_custom_call.1} parent=0 // pred_check
    _
  $region11: #{tpu_custom_call.1} parent=0 // pred_check_branch
    %19 = sbr.rel (0) target = $region13
  $region12: #{tpu_custom_call.1} parent=0 // pred_region
    _
  $region13: #{tpu_custom_call.1} parent=0 // pred_fallthru
    _
  // Predicated region
  $region14: #{tpu_custom_call.1} parent=0 // pred_check
    _
  $region15: #{tpu_custom_call.1} parent=0 // pred_check_branch
    %21 = sbr.rel (0) target = $region17
  $region16: #{tpu_custom_call.1} parent=0 // pred_region
    _
  $region17: #{tpu_custom_call.1} parent=0 // pred_fallthru
    _
  // Predicated region
  $region18: #{tpu_custom_call.1} parent=0 // pred_check
    _
  $region19: #{tpu_custom_call.1} parent=0 // pred_check_branch
    %23 = sbr.rel (0) target = $region21
  $region20: #{tpu_custom_call.1} parent=0 // pred_region
    _
  $region21: #{tpu_custom_call.1} parent=0 // pred_fallthru
    _
  // Predicated region
  $region22: #{tpu_custom_call.1} parent=0 // pred_check
    _
  $region23: #{tpu_custom_call.1} parent=0 // pred_check_branch
    %25 = sbr.rel (0) target = $region25
  $region24: #{tpu_custom_call.1} parent=0 // pred_region
    _
  $region25: #{tpu_custom_call.1} parent=0 // pred_fallthru
    _
  // Predicated region
  $region26: #{tpu_custom_call.1} parent=0 // pred_check
    _
  $region27: #{tpu_custom_call.1} parent=0 // pred_check_branch
    %27 = sbr.rel (0) target = $region29
  $region28: #{tpu_custom_call.1} parent=0 // pred_region
    _
  $region29: #{tpu_custom_call.1} parent=0 // pred_fallthru
    _
  // Predicated region
  $region30: #{tpu_custom_call.1} parent=0 // pred_check
    _
  $region31: #{tpu_custom_call.1} parent=0 // pred_check_branch
    %29 = sbr.rel (0) target = $region33
  $region32: #{tpu_custom_call.1} parent=0 // pred_region
    _
  $region33: #{tpu_custom_call.1} parent=0 // pred_fallthru
    _
  // Predicated region
  $region34: #{tpu_custom_call.1} parent=0 // pred_check
    _
  $region35: #{tpu_custom_call.1} parent=0 // pred_check_branch
    %31 = sbr.rel (0) target = $region37
  $region36: #{tpu_custom_call.1} parent=0 // pred_region
    _
  $region37: #{tpu_custom_call.1} parent=0 // pred_fallthru
    _
  %v32 = vld [vmem:[%s0] sm:$0xff]
  %v33 = vld [vmem:[%s1] sm:$0xff]
  %v34 = vld [vmem:[%s2] sm:$0xff]
  %v35 = vld [vmem:[%s2 + $0x8] sm:$0xff]
  %v36 = vld [vmem:[%s2 + $0x10] sm:$0xff]
  %v37 = vld [vmem:[%s3] sm:$0xff]
  %vm38 = vcmask 64512
  %v40 = vsel %vm38, %v33, 0
  %42 = vmatpush.msra.mxu0 0.0
  %43 = vmatpush.msra.mxu0 0.0
  %44 = vmatpush.msra.mxu0 0.0
  %45 = vmatpush.msra.mxu0 0.0
  %46 = vmatpush.msra.mxu0 0.0
  %47 = vmatpush.msra.mxu0 0.0
  %48 = vmatpush.msra.mxu0 0.0
  %49 = vmatpush.msra.mxu0 0.0
  %50 = vmatpush.msra.mxu0 0.0
  %51 = vmatpush.msra.mxu0 0.0
  %52 = vmatpush.msra.mxu0 0.0
  %53 = vmatpush.msra.mxu0 0.0
  %54 = vmatpush.msra.mxu0 0.0
  %55 = vmatpush.msra.mxu0 0.0
  %56 = vmatpush.msra.mxu0 0.0
  %57 = vmatpush.msra.mxu0 %v37
  %58 = vmatmul.f32.gmra.mxu0 %v40
  %v59 = vpop.f32.mrf.mxu0
  %v60 = vadd.f32 0.0, %v59
  %61 = vdwg.mxu0
  %vm62 = vcmask 195584
  %v64 = vsel %vm62, %v32, 0
  %66 = vmatpush.msra.mxu0 0.0
  %67 = vmatpush.msra.mxu0 0.0
  %68 = vmatpush.msra.mxu0 0.0
  %69 = vmatpush.msra.mxu0 0.0
  %70 = vmatpush.msra.mxu0 0.0
  %71 = vmatpush.msra.mxu0 0.0
  %72 = vmatpush.msra.mxu0 0.0
  %73 = vmatpush.msra.mxu0 0.0
  %74 = vmatpush.msra.mxu0 0.0
  %75 = vmatpush.msra.mxu0 0.0
  %76 = vmatpush.msra.mxu0 0.0
  %77 = vmatpush.msra.mxu0 0.0
  %78 = vmatpush.msra.mxu0 0.0
  %79 = vmatpush.msra.mxu0 %v36
  %80 = vmatpush.msra.mxu0 %v35
  %81 = vmatpush.msra.mxu0 %v34
  %82 = vmatmul.f32.gmra.mxu0 %v64
  %v83 = vpop.f32.mrf.mxu0
  %v84 = vadd.f32 %v60, %v83
  %85 = vdwg.mxu0
  %v86 = vld [vmem:[%s4] sm:$0x1]
  %v88 = vperm.slane %v86, 0
  %v90 = vadd.f32 %v84, %v88
  %v91 = vmax.f32 %v90, 0.0
  %v92 = vld [vmem:[%s5] sm:$0xff]
  %v93 = vld [vmem:[%s5 + $0x8] sm:$0xff]
  %v94 = vld [vmem:[%s5 + $0x10] sm:$0xff]
  %v95 = vld [vmem:[%s5 + $0x18] sm:$0xff]
  %v96 = vld [vmem:[%s5 + $0x20] sm:$0xff]
  %v97 = vld [vmem:[%s5 + $0x28] sm:$0xff]
  %v98 = vld [vmem:[%s5 + $0x30] sm:$0xff]
  %v99 = vld [vmem:[%s5 + $0x38] sm:$0xff]
  %v100 = vld [vmem:[%s5 + $0x40] sm:$0xff]
  %v101 = vld [vmem:[%s5 + $0x48] sm:$0xff]
  %v102 = vld [vmem:[%s5 + $0x50] sm:$0xff]
  %v103 = vld [vmem:[%s5 + $0x58] sm:$0xff]
  %v104 = vld [vmem:[%s5 + $0x60] sm:$0xff]
  %v105 = vld [vmem:[%s5 + $0x68] sm:$0xff]
  %v106 = vld [vmem:[%s5 + $0x70] sm:$0xff]
  %v107 = vld [vmem:[%s5 + $0x78] sm:$0xff]
  %v108 = vld [vmem:[%s6] sm:$0x1]
  %v110 = vperm.slane %v108, 0
  %112 = vmatpush.msra.mxu0 %v107
  %113 = vmatpush.msra.mxu0 %v106
  %114 = vmatpush.msra.mxu0 %v105
  %115 = vmatpush.msra.mxu0 %v104
  %116 = vmatpush.msra.mxu0 %v103
  %117 = vmatpush.msra.mxu0 %v102
  %118 = vmatpush.msra.mxu0 %v101
  %119 = vmatpush.msra.mxu0 %v100
  %120 = vmatpush.msra.mxu0 %v99
  %121 = vmatpush.msra.mxu0 %v98
  %122 = vmatpush.msra.mxu0 %v97
  %123 = vmatpush.msra.mxu0 %v96
  %124 = vmatpush.msra.mxu0 %v95
  %125 = vmatpush.msra.mxu0 %v94
  %126 = vmatpush.msra.mxu0 %v93
  %127 = vmatpush.msra.mxu0 %v92
  %128 = vmatmul.f32.gmra.mxu0 %v91
  %v129 = vpop.f32.mrf.mxu0
  %v130 = vadd.f32 %v110, %v129
  %131 = vdwg.mxu0
  %v132 = vmax.f32 %v130, 0.0
  %v133 = vld [vmem:[%s7] sm:$0xff]
  %v134 = vld [vmem:[%s7 + $0x8] sm:$0xff]
  %v135 = vld [vmem:[%s7 + $0x10] sm:$0xff]
  %v136 = vld [vmem:[%s7 + $0x18] sm:$0xff]
  %v137 = vld [vmem:[%s7 + $0x20] sm:$0xff]
  %v138 = vld [vmem:[%s7 + $0x28] sm:$0xff]
  %v139 = vld [vmem:[%s7 + $0x30] sm:$0xff]
  %v140 = vld [vmem:[%s7 + $0x38] sm:$0xff]
  %v141 = vld [vmem:[%s8] sm:$0x1]
  %v143 = vperm.slane %v141, 0
  %vm145 = vcmask 523264
  %v147 = vsel %vm145, %v132, 0
  %149 = vmatpush.msra.mxu0 0.0
  %150 = vmatpush.msra.mxu0 0.0
  %151 = vmatpush.msra.mxu0 0.0
  %152 = vmatpush.msra.mxu0 0.0
  %153 = vmatpush.msra.mxu0 0.0
  %154 = vmatpush.msra.mxu0 0.0
  %155 = vmatpush.msra.mxu0 0.0
  %156 = vmatpush.msra.mxu0 0.0
  %157 = vmatpush.msra.mxu0 %v140
  %158 = vmatpush.msra.mxu0 %v139
  %159 = vmatpush.msra.mxu0 %v138
  %160 = vmatpush.msra.mxu0 %v137
  %161 = vmatpush.msra.mxu0 %v136
  %162 = vmatpush.msra.mxu0 %v135
  %163 = vmatpush.msra.mxu0 %v134
  %164 = vmatpush.msra.mxu0 %v133
  %165 = vmatmul.f32.gmra.mxu0 %v147
  %v166 = vpop.f32.mrf.mxu0
  %v167 = vadd.f32 %v143, %v166
  %168 = vdwg.mxu0
  %vm169 = vcmask 15360
  %170 = vst.msk [vmem:[%s9] sm:$0xff] %vm169, %v167
  // Predicated region
  $region38: #{tpu_custom_call.1} parent=0 // pred_check
    _
  $region39: #{tpu_custom_call.1} parent=0 // pred_check_branch
    %172 = sbr.rel (0) target = $region41
  $region40: #{tpu_custom_call.1} parent=0 // pred_region
    _
  $region41: #{tpu_custom_call.1} parent=0 // pred_fallthru
    _
  // Predicated region
  $region42: #{tpu_custom_call.1} parent=0 // pred_check
    _
  $region43: #{tpu_custom_call.1} parent=0 // pred_check_branch
    %174 = sbr.rel (0) target = $region45
  $region44: #{tpu_custom_call.1} parent=0 // pred_region
    _
  $region45: #{tpu_custom_call.1} parent=0 // pred_fallthru
    _

</llo_original>
